<compile_context>
chip_gen: v6e
topology: v6e:2x2x1
jax: 0.10.0
libtpu: 0.0.40
codegen_flags: <defaults>
</compile_context>

<pallas_src>
import functools

import jax
import jax.numpy as jnp
from jax.experimental import pallas as pl
from jax.experimental.pallas import tpu as pltpu


def _round_up(n, m):
    return ((n + m - 1) // m) * m


def _mlp_kernel(x_ref, w1_ref, b1_ref, w2_ref, b2_ref, w3_ref, b3_ref, o_ref):
    """One (TB, F) batch tile: fc3(relu(fc2(relu(fc1(x)))))."""
    cdt = w1_ref.dtype  # dtype fed to the MXU (f32 or bf16)
    x = x_ref[...]
    h1 = jnp.dot(x, w1_ref[...], preferred_element_type=jnp.float32) + b1_ref[...]
    h1 = jnp.maximum(h1, 0.0).astype(cdt)
    h2 = jnp.dot(h1, w2_ref[...], preferred_element_type=jnp.float32) + b2_ref[...]
    h2 = jnp.maximum(h2, 0.0).astype(cdt)
    out = jnp.dot(h2, w3_ref[...], preferred_element_type=jnp.float32) + b3_ref[...]
    o_ref[...] = out.astype(o_ref.dtype)
    # TODO(synk): the PyTorch module returns raw logits; a softmax head could be
    # fused here (EUP exp + pl.reciprocal) if callers always sample from it.


# Double-buffered activation budget per kernel (bytes): leaves ample headroom
# under the 32 MiB scoped VMEM default and v7x's 64 MiB physical per-TC VMEM.
_VMEM_ACT_BUDGET = 16 * 1024 * 1024


def _choose_batch_tile(batch, feat, out, itemsize, requested):
    """Largest batch tile (multiple of 8) whose double-buffered x/out tiles fit."""
    per_row = 2 * (feat * itemsize + out * 4)  # 2x = double buffering; out is f32
    cap = max(8, (_VMEM_ACT_BUDGET // per_row) // 8 * 8)
    tb = min(max(8, (requested // 8) * 8), cap, _round_up(batch, 8))
    return max(8, (tb // 8) * 8)


@functools.partial(jax.jit, static_argnames=("block_b", "use_bf16"))
def policy_network_forward(x, w1, b1, w2, b2, w3, b3, *, block_b=1024, use_bf16=False):
    """x: (B, ...) -> flattened to (B, input_size). Returns f32 logits (B, output_size)."""
    B = x.shape[0]
    x2d = x.reshape(B, -1)                     # nn.Flatten()
    F = x2d.shape[1]
    H = w1.shape[1]
    O = w3.shape[1]

    cdt = jnp.bfloat16 if use_bf16 else jnp.float32
    x2d = x2d.astype(cdt)
    w1c, w2c, w3c = w1.astype(cdt), w2.astype(cdt), w3.astype(cdt)
    b1c, b2c, b3c = (b.astype(jnp.float32) for b in (b1, b2, b3))

    tb = _choose_batch_tile(B, F, O, jnp.dtype(cdt).itemsize, block_b)
    Bp = _round_up(B, tb)
    if Bp != B:
        x2d = jnp.pad(x2d, ((0, Bp - B), (0, 0)))

    resident = lambda shape: pl.BlockSpec(shape, lambda i: (0, 0))

    out = pl.pallas_call(
        _mlp_kernel,
        out_shape=jax.ShapeDtypeStruct((Bp, O), jnp.float32),
        grid=(Bp // tb,),
        in_specs=[
            pl.BlockSpec((tb, F), lambda i: (i, 0)),   # streamed batch tiles
            resident((F, H)), resident((1, H)),        # fc1
            resident((H, H)), resident((1, H)),        # fc2
            resident((H, O)), resident((1, O)),        # fc3
        ],
        out_specs=pl.BlockSpec((tb, O), lambda i: (i, 0)),
        compiler_params=pltpu.CompilerParams(
            dimension_semantics=("parallel",),          # megacore sharding on v7x
            vmem_limit_bytes=32 * 1024 * 1024,
        ),
    )(x2d, w1c, b1c, w2c, b2c, w3c, b3c)
    return out[:B]


def init_linear_params(key, in_features, out_features):
    """torch.nn.Linear-style init (uniform +/- 1/sqrt(fan_in)), weight stored transposed."""
    kw, kb = jax.random.split(key)
    bound = 1.0 / jnp.sqrt(jnp.float32(in_features))
    w = jax.random.uniform(kw, (in_features, out_features), jnp.float32, -bound, bound)
    b = jax.random.uniform(kb, (1, out_features), jnp.float32, -bound, bound)
    return w, b


def reference_forward(x, w1, b1, w2, b2, w3, b3):
    """Pure-JAX reference for correctness check."""
    B = x.shape[0]
    x2d = x.reshape(B, -1).astype(jnp.float32)
    h1 = jnp.maximum(x2d @ w1 + b1, 0.0)
    h2 = jnp.maximum(h1 @ w2 + b2, 0.0)
    return h2 @ w3 + b3


if __name__ == "__main__":
    # Shapes consistent with the module:
    #   input tensor (B, C, H, W) = (2, 4, 4, 4) -> input_size = 64
    #   hidden_size = 32, output_size = 8
    B, C, Himg, Wimg = 2, 4, 4, 4
    input_size = C * Himg * Wimg
    hidden_size = 32
    output_size = 8

    key = jax.random.PRNGKey(0)
    kx, k1, k2, k3 = jax.random.split(key, 4)

    x = jax.random.normal(kx, (B, C, Himg, Wimg), jnp.float32)  # NCHW-style input
    w1, b1 = init_linear_params(k1, input_size, hidden_size)
    w2, b2 = init_linear_params(k2, hidden_size, hidden_size)
    w3, b3 = init_linear_params(k3, hidden_size, output_size)

    # 1) f32 path at the demo batch (padded to one 8-row tile internally).
    out = jax.block_until_ready(policy_network_forward(x, w1, b1, w2, b2, w3, b3))
    ref = reference_forward(x, w1, b1, w2, b2, w3, b3)
    assert out.shape == (B, output_size)
    assert jnp.allclose(out, ref, atol=1e-5, rtol=1e-5), "f32 Pallas kernel mismatch"

    # 2) Multi-tile grid + batch-padding path (B not a multiple of the tile).
    B2 = 37
    x2 = jax.random.normal(jax.random.PRNGKey(1), (B2, C, Himg, Wimg), jnp.float32)
    out2 = jax.block_until_ready(
        policy_network_forward(x2, w1, b1, w2, b2, w3, b3, block_b=16))
    ref2 = reference_forward(x2, w1, b1, w2, b2, w3, b3)
    assert out2.shape == (B2, output_size)
    assert jnp.allclose(out2, ref2, atol=1e-5, rtol=1e-5), "tiled Pallas kernel mismatch"

    # 3) bf16-fed MXU path (v6e/v7x HBM-bound optimization); f32 accumulation.
    out_bf16 = jax.block_until_ready(
        policy_network_forward(x2, w1, b1, w2, b2, w3, b3, block_b=16, use_bf16=True))
    assert out_bf16.shape == (B2, output_size)
    assert jnp.allclose(out_bf16, ref2, atol=5e-2, rtol=5e-2), "bf16 Pallas kernel mismatch"

    print("KERNEL_OK")
</pallas_src>

<mosaic_0001>
module attributes {stable_mosaic.version = 11 : i64} {
  func.func @_mlp_kernel(%arg0: i32, %arg1: memref<8x64xf32, #tpu.memory_space<vmem>>, %arg2: memref<64x32xf32, #tpu.memory_space<vmem>>, %arg3: memref<1x32xf32, #tpu.memory_space<vmem>>, %arg4: memref<32x32xf32, #tpu.memory_space<vmem>>, %arg5: memref<1x32xf32, #tpu.memory_space<vmem>>, %arg6: memref<32x8xf32, #tpu.memory_space<vmem>>, %arg7: memref<1x8xf32, #tpu.memory_space<vmem>>, %arg8: memref<8x8xf32, #tpu.memory_space<vmem>>) attributes {dimension_semantics = [#tpu.dimension_semantics<parallel>], iteration_bounds = array<i64: 1>, scalar_prefetch = 0 : i64, scratch_operands = 0 : i64, tpu.core_type = #tpu.core_type<tc>, window_params = [{transform_indices = @transform_0, window_bounds = array<i64: 8, 64>}, {pipeline_mode = #tpu.pipeline_mode<synchronous>, transform_indices = @transform_1, window_bounds = array<i64: 64, 32>}, {pipeline_mode = #tpu.pipeline_mode<synchronous>, transform_indices = @transform_2, window_bounds = array<i64: 1, 32>}, {pipeline_mode = #tpu.pipeline_mode<synchronous>, transform_indices = @transform_3, window_bounds = array<i64: 32, 32>}, {pipeline_mode = #tpu.pipeline_mode<synchronous>, transform_indices = @transform_4, window_bounds = array<i64: 1, 32>}, {pipeline_mode = #tpu.pipeline_mode<synchronous>, transform_indices = @transform_5, window_bounds = array<i64: 32, 8>}, {pipeline_mode = #tpu.pipeline_mode<synchronous>, transform_indices = @transform_6, window_bounds = array<i64: 1, 8>}, {transform_indices = @transform_7, window_bounds = array<i64: 8, 8>}]} {
    %c0 = arith.constant 0 : index
    %c0_0 = arith.constant 0 : index
    %0 = vector.load %arg1[%c0, %c0_0] : memref<8x64xf32, #tpu.memory_space<vmem>>, vector<8x64xf32>
    %c0_1 = arith.constant 0 : index
    %c0_2 = arith.constant 0 : index
    %1 = vector.load %arg2[%c0_1, %c0_2] : memref<64x32xf32, #tpu.memory_space<vmem>>, vector<64x32xf32>
    %cst = arith.constant dense<0.000000e+00> : vector<8x32xf32>
    %2 = tpu.matmul %0, %1, %cst {dimension_numbers = #tpu.dot_dimension_numbers<[1], [0], [0], [1], [0, 0, 1, 1], [], []>} : vector<8x64xf32>, vector<64x32xf32>, vector<8x32xf32> -> vector<8x32xf32>
    %c0_3 = arith.constant 0 : index
    %c0_4 = arith.constant 0 : index
    %3 = vector.load %arg3[%c0_3, %c0_4] : memref<1x32xf32, #tpu.memory_space<vmem>>, vector<1x32xf32>
    %4 = vector.broadcast %3 : vector<1x32xf32> to vector<8x32xf32>
    %5 = arith.addf %2, %4 : vector<8x32xf32>
    %cst_5 = arith.constant 0.000000e+00 : f32
    %6 = vector.broadcast %cst_5 : f32 to vector<8x32xf32>
    %7 = arith.maximumf %5, %6 : vector<8x32xf32>
    %c0_6 = arith.constant 0 : index
    %c0_7 = arith.constant 0 : index
    %8 = vector.load %arg4[%c0_6, %c0_7] : memref<32x32xf32, #tpu.memory_space<vmem>>, vector<32x32xf32>
    %cst_8 = arith.constant dense<0.000000e+00> : vector<8x32xf32>
    %9 = tpu.matmul %7, %8, %cst_8 {dimension_numbers = #tpu.dot_dimension_numbers<[1], [0], [0], [1], [0, 0, 1, 1], [], []>} : vector<8x32xf32>, vector<32x32xf32>, vector<8x32xf32> -> vector<8x32xf32>
    %c0_9 = arith.constant 0 : index
    %c0_10 = arith.constant 0 : index
    %10 = vector.load %arg5[%c0_9, %c0_10] : memref<1x32xf32, #tpu.memory_space<vmem>>, vector<1x32xf32>
    %11 = vector.broadcast %10 : vector<1x32xf32> to vector<8x32xf32>
    %12 = arith.addf %9, %11 : vector<8x32xf32>
    %cst_11 = arith.constant 0.000000e+00 : f32
    %13 = vector.broadcast %cst_11 : f32 to vector<8x32xf32>
    %14 = arith.maximumf %12, %13 : vector<8x32xf32>
    %c0_12 = arith.constant 0 : index
    %c0_13 = arith.constant 0 : index
    %15 = vector.load %arg6[%c0_12, %c0_13] : memref<32x8xf32, #tpu.memory_space<vmem>>, vector<32x8xf32>
    %cst_14 = arith.constant dense<0.000000e+00> : vector<8x8xf32>
    %16 = tpu.matmul %14, %15, %cst_14 {dimension_numbers = #tpu.dot_dimension_numbers<[1], [0], [0], [1], [0, 0, 1, 1], [], []>} : vector<8x32xf32>, vector<32x8xf32>, vector<8x8xf32> -> vector<8x8xf32>
    %c0_15 = arith.constant 0 : index
    %c0_16 = arith.constant 0 : index
    %17 = vector.load %arg7[%c0_15, %c0_16] : memref<1x8xf32, #tpu.memory_space<vmem>>, vector<1x8xf32>
    %18 = vector.broadcast %17 : vector<1x8xf32> to vector<8x8xf32>
    %19 = arith.addf %16, %18 : vector<8x8xf32>
    %c0_17 = arith.constant 0 : index
    %c0_18 = arith.constant 0 : index
    %20 = vector.load %arg8[%c0_17, %c0_18] : memref<8x8xf32, #tpu.memory_space<vmem>>, vector<8x8xf32>
    tpu.vector_store %arg8[%c0_17, %c0_18], %19 {strides = array<i32>} : memref<8x8xf32, #tpu.memory_space<vmem>>, vector<8x8xf32>,
    return
  }
  func.func @transform_0(%arg0: i32) -> (i32, i32) {
    %c0_i32 = arith.constant 0 : i32
    %c0_i32_0 = arith.constant 0 : i32
    return %arg0, %c0_i32 : i32, i32
  }
  func.func @transform_1(%arg0: i32) -> (i32, i32) {
    %c0_i32 = arith.constant 0 : i32
    %c0_i32_0 = arith.constant 0 : i32
    %c0_i32_1 = arith.constant 0 : i32
    return %c0_i32, %c0_i32_0 : i32, i32
  }
  func.func @transform_2(%arg0: i32) -> (i32, i32) {
    %c0_i32 = arith.constant 0 : i32
    %c0_i32_0 = arith.constant 0 : i32
    %c0_i32_1 = arith.constant 0 : i32
    return %c0_i32, %c0_i32_0 : i32, i32
  }
  func.func @transform_3(%arg0: i32) -> (i32, i32) {
    %c0_i32 = arith.constant 0 : i32
    %c0_i32_0 = arith.constant 0 : i32
    %c0_i32_1 = arith.constant 0 : i32
    return %c0_i32, %c0_i32_0 : i32, i32
  }
  func.func @transform_4(%arg0: i32) -> (i32, i32) {
    %c0_i32 = arith.constant 0 : i32
    %c0_i32_0 = arith.constant 0 : i32
    %c0_i32_1 = arith.constant 0 : i32
    return %c0_i32, %c0_i32_0 : i32, i32
  }
  func.func @transform_5(%arg0: i32) -> (i32, i32) {
    %c0_i32 = arith.constant 0 : i32
    %c0_i32_0 = arith.constant 0 : i32
    %c0_i32_1 = arith.constant 0 : i32
    return %c0_i32, %c0_i32_0 : i32, i32
  }
  func.func @transform_6(%arg0: i32) -> (i32, i32) {
    %c0_i32 = arith.constant 0 : i32
    %c0_i32_0 = arith.constant 0 : i32
    %c0_i32_1 = arith.constant 0 : i32
    return %c0_i32, %c0_i32_0 : i32, i32
  }
  func.func @transform_7(%arg0: i32) -> (i32, i32) {
    %c0_i32 = arith.constant 0 : i32
    %c0_i32_0 = arith.constant 0 : i32
    return %arg0, %c0_i32 : i32, i32
  }
}

</mosaic_0001>

<llo_original>
// kernel: policy_network_forward.1
$region0: #{policy_network_forward.1}
  #allocation0 [shape = 'u32[]', space=smem, size = 0x4, offset = 0x4, fixed_abs, tag = 'smem constant byte address 0x4 - core index']
  #allocation1 [shape = 'u32[144,128]{1,0:T(1,128)}', space=vmem, size = 0x12000, scoped, tag = 'internal scratch']
  %s0 = inlined_call_operand.vmem [shape: f32[8,64], index: 0, kind: input, shape index: {}]
  %s1 = inlined_call_operand.vmem [shape: f32[64,32], index: 1, kind: input, shape index: {}]
  %s2 = inlined_call_operand.vmem [shape: f32[1,32], index: 2, kind: input, shape index: {}]
  %s3 = inlined_call_operand.vmem [shape: f32[32,32], index: 3, kind: input, shape index: {}]
  %s4 = inlined_call_operand.vmem [shape: f32[1,32], index: 4, kind: input, shape index: {}]
  %s5 = inlined_call_operand.vmem [shape: f32[32,8], index: 5, kind: input, shape index: {}]
  %s6 = inlined_call_operand.vmem [shape: f32[1,8], index: 6, kind: input, shape index: {}]
  %s7 = inlined_call_operand.vmem [shape: f32[8,8], index: 7, kind: output, shape index: {}]
  %s8 = sld [smem:[#allocation0]]
  $region38: #{policy_network_forward.1} parent=0
    _
  %s10 = ssub.s32 1, %s8
  %s11 = scalar_select 0, %s10, %s8
  // Predicated region
  $region2: #{policy_network_forward.1} parent=0 // pred_check
    _
  $region3: #{policy_network_forward.1} parent=0 // pred_check_branch
    %13 = sbr.rel (0) target = $region5
  $region4: #{policy_network_forward.1} parent=0 // pred_region
    _
  $region5: #{policy_network_forward.1} parent=0 // pred_fallthru
    _
  // Predicated region
  $region6: #{policy_network_forward.1} parent=0 // pred_check
    _
  $region7: #{policy_network_forward.1} parent=0 // pred_check_branch
    %15 = sbr.rel (0) target = $region9
  $region8: #{policy_network_forward.1} parent=0 // pred_region
    _
  $region9: #{policy_network_forward.1} parent=0 // pred_fallthru
    _
  // Predicated region
  $region10: #{policy_network_forward.1} parent=0 // pred_check
    _
  $region11: #{policy_network_forward.1} parent=0 // pred_check_branch
    %17 = sbr.rel (0) target = $region13
  $region12: #{policy_network_forward.1} parent=0 // pred_region
    _
  $region13: #{policy_network_forward.1} parent=0 // pred_fallthru
    _
  // Predicated region
  $region14: #{policy_network_forward.1} parent=0 // pred_check
    _
  $region15: #{policy_network_forward.1} parent=0 // pred_check_branch
    %19 = sbr.rel (0) target = $region17
  $region16: #{policy_network_forward.1} parent=0 // pred_region
    _
  $region17: #{policy_network_forward.1} parent=0 // pred_fallthru
    _
  // Predicated region
  $region18: #{policy_network_forward.1} parent=0 // pred_check
    _
  $region19: #{policy_network_forward.1} parent=0 // pred_check_branch
    %21 = sbr.rel (0) target = $region21
  $region20: #{policy_network_forward.1} parent=0 // pred_region
    _
  $region21: #{policy_network_forward.1} parent=0 // pred_fallthru
    _
  // Predicated region
  $region22: #{policy_network_forward.1} parent=0 // pred_check
    _
  $region23: #{policy_network_forward.1} parent=0 // pred_check_branch
    %23 = sbr.rel (0) target = $region25
  $region24: #{policy_network_forward.1} parent=0 // pred_region
    _
  $region25: #{policy_network_forward.1} parent=0 // pred_fallthru
    _
  // Predicated region
  $region26: #{policy_network_forward.1} parent=0 // pred_check
    _
  $region27: #{policy_network_forward.1} parent=0 // pred_check_branch
    %25 = sbr.rel (0) target = $region29
  $region28: #{policy_network_forward.1} parent=0 // pred_region
    _
  $region29: #{policy_network_forward.1} parent=0 // pred_fallthru
    _
  %v26 = vld [vmem:[%s0] sm:$0xff]
  %v27 = vld [vmem:[%s1] sm:$0xff]
  %v28 = vld [vmem:[%s1 + $0x8] sm:$0xff]
  %v29 = vld [vmem:[%s1 + $0x10] sm:$0xff]
  %v30 = vld [vmem:[%s1 + $0x18] sm:$0xff]
  %v31 = vld [vmem:[%s1 + $0x20] sm:$0xff]
  %v32 = vld [vmem:[%s1 + $0x28] sm:$0xff]
  %v33 = vld [vmem:[%s1 + $0x30] sm:$0xff]
  %v34 = vld [vmem:[%s1 + $0x38] sm:$0xff]
  %v35 = vld [vmem:[%s2] sm:$0x1]
  %v37 = vlaneseq
  %v38 = vshrl.u32 %v37, 7
  %v39 = vsub.s32 0, %v38
  %v40 = vrot.slane %v35, %v39
  %vm42 = vcmask 523264
  %v44 = vsel %vm42, %v26, 0
  %46 = vmatprep.subr.mxu0 0.0
  %47 = vmatpush1.msra.mxu0 0.0
  %48 = vmatprep.subr.mxu0 0.0
  %49 = vmatpush1.msra.mxu0 0.0
  %50 = vmatprep.subr.mxu0 0.0
  %51 = vmatpush1.msra.mxu0 0.0
  %52 = vmatprep.subr.mxu0 0.0
  %53 = vmatpush1.msra.mxu0 0.0
  %54 = vmatprep.subr.mxu0 0.0
  %55 = vmatpush1.msra.mxu0 0.0
  %56 = vmatprep.subr.mxu0 0.0
  %57 = vmatpush1.msra.mxu0 0.0
  %58 = vmatprep.subr.mxu0 0.0
  %59 = vmatpush1.msra.mxu0 0.0
  %60 = vmatprep.subr.mxu0 0.0
  %61 = vmatpush1.msra.mxu0 0.0
  %62 = vmatprep.subr.mxu0 0.0
  %63 = vmatpush1.msra.mxu0 %v34
  %64 = vmatprep.subr.mxu0 0.0
  %65 = vmatpush1.msra.mxu0 %v33
  %66 = vmatprep.subr.mxu0 0.0
  %67 = vmatpush1.msra.mxu0 %v32
  %68 = vmatprep.subr.mxu0 0.0
  %69 = vmatpush1.msra.mxu0 %v31
  %70 = vmatprep.subr.mxu0 0.0
  %71 = vmatpush1.msra.mxu0 %v30
  %72 = vmatprep.subr.mxu0 0.0
  %73 = vmatpush1.msra.mxu0 %v29
  %74 = vmatprep.subr.mxu0 0.0
  %75 = vmatpush1.msra.mxu0 %v28
  %76 = vmatprep.subr.mxu0 0.0
  %77 = vmatpush1.msra.mxu0 %v27
  %78 = vmatprep.subr.mxu0 0.0
  %79 = vmatpush2.msra.mxu0 0.0
  %80 = vmatprep.subr.mxu0 0.0
  %81 = vmatpush2.msra.mxu0 0.0
  %82 = vmatprep.subr.mxu0 0.0
  %83 = vmatpush2.msra.mxu0 0.0
  %84 = vmatprep.subr.mxu0 0.0
  %85 = vmatpush2.msra.mxu0 0.0
  %86 = vmatprep.subr.mxu0 0.0
  %87 = vmatpush2.msra.mxu0 0.0
  %88 = vmatprep.subr.mxu0 0.0
  %89 = vmatpush2.msra.mxu0 0.0
  %90 = vmatprep.subr.mxu0 0.0
  %91 = vmatpush2.msra.mxu0 0.0
  %92 = vmatprep.subr.mxu0 0.0
  %93 = vmatpush2.msra.mxu0 0.0
  %94 = vmatprep.subr.mxu0 0.0
  %95 = vmatpush2.msra.mxu0 0.0
  %96 = vmatprep.subr.mxu0 0.0
  %97 = vmatpush2.msra.mxu0 0.0
  %98 = vmatprep.subr.mxu0 0.0
  %99 = vmatpush2.msra.mxu0 0.0
  %100 = vmatprep.subr.mxu0 0.0
  %101 = vmatpush2.msra.mxu0 0.0
  %102 = vmatprep.subr.mxu0 0.0
  %103 = vmatpush2.msra.mxu0 0.0
  %104 = vmatprep.subr.mxu0 0.0
  %105 = vmatpush2.msra.mxu0 0.0
  %106 = vmatprep.subr.mxu0 0.0
  %107 = vmatpush2.msra.mxu0 0.0
  %108 = vmatprep.subr.mxu0 0.0
  %109 = vmatpush2.msra.mxu0 0.0
  %110 = vmatprep.mubr.f32.mxu0 0.0
  %111 = vmatmul.mubr.f32.gmra.mxu0 %v44
  %v112 = vpop.f32.mrf.mxu0
  %v113 = vadd.f32 %v40, %v112
  %v114 = vpop.f32.mrf.mxu0
  %115 = vdwg.mxu0
  %v116 = vmax.f32 %v113, 0.0
  %v117 = vld [vmem:[%s3] sm:$0xff]
  %v118 = vld [vmem:[%s3 + $0x8] sm:$0xff]
  %v119 = vld [vmem:[%s3 + $0x10] sm:$0xff]
  %v120 = vld [vmem:[%s3 + $0x18] sm:$0xff]
  %v121 = vld [vmem:[%s4] sm:$0x1]
  %v123 = vlaneseq
  %v124 = vshrl.u32 %v123, 7
  %v125 = vsub.s32 0, %v124
  %v126 = vrot.slane %v121, %v125
  %vm128 = vcmask 261120
  %v130 = vsel %vm128, %v116, 0
  %132 = vmatprep.subr.mxu0 0.0
  %133 = vmatpush1.msra.mxu0 0.0
  %134 = vmatprep.subr.mxu0 0.0
  %135 = vmatpush1.msra.mxu0 0.0
  %136 = vmatprep.subr.mxu0 0.0
  %137 = vmatpush1.msra.mxu0 0.0
  %138 = vmatprep.subr.mxu0 0.0
  %139 = vmatpush1.msra.mxu0 0.0
  %140 = vmatprep.subr.mxu0 0.0
  %141 = vmatpush1.msra.mxu0 0.0
  %142 = vmatprep.subr.mxu0 0.0
  %143 = vmatpush1.msra.mxu0 0.0
  %144 = vmatprep.subr.mxu0 0.0
  %145 = vmatpush1.msra.mxu0 0.0
  %146 = vmatprep.subr.mxu0 0.0
  %147 = vmatpush1.msra.mxu0 0.0
  %148 = vmatprep.subr.mxu0 0.0
  %149 = vmatpush1.msra.mxu0 0.0
  %150 = vmatprep.subr.mxu0 0.0
  %151 = vmatpush1.msra.mxu0 0.0
  %152 = vmatprep.subr.mxu0 0.0
  %153 = vmatpush1.msra.mxu0 0.0
  %154 = vmatprep.subr.mxu0 0.0
  %155 = vmatpush1.msra.mxu0 0.0
  %156 = vmatprep.subr.mxu0 0.0
  %157 = vmatpush1.msra.mxu0 %v120
  %158 = vmatprep.subr.mxu0 0.0
  %159 = vmatpush1.msra.mxu0 %v119
  %160 = vmatprep.subr.mxu0 0.0
  %161 = vmatpush1.msra.mxu0 %v118
  %162 = vmatprep.subr.mxu0 0.0
  %163 = vmatpush1.msra.mxu0 %v117
  %164 = vmatprep.subr.mxu0 0.0
  %165 = vmatpush2.msra.mxu0 0.0
  %166 = vmatprep.subr.mxu0 0.0
  %167 = vmatpush2.msra.mxu0 0.0
  %168 = vmatprep.subr.mxu0 0.0
  %169 = vmatpush2.msra.mxu0 0.0
  %170 = vmatprep.subr.mxu0 0.0
  %171 = vmatpush2.msra.mxu0 0.0
  %172 = vmatprep.subr.mxu0 0.0
  %173 = vmatpush2.msra.mxu0 0.0
  %174 = vmatprep.subr.mxu0 0.0
  %175 = vmatpush2.msra.mxu0 0.0
  %176 = vmatprep.subr.mxu0 0.0
  %177 = vmatpush2.msra.mxu0 0.0
  %178 = vmatprep.subr.mxu0 0.0
  %179 = vmatpush2.msra.mxu0 0.0
  %180 = vmatprep.subr.mxu0 0.0
  %181 = vmatpush2.msra.mxu0 0.0
  %182 = vmatprep.subr.mxu0 0.0
  %183 = vmatpush2.msra.mxu0 0.0
  %184 = vmatprep.subr.mxu0 0.0
  %185 = vmatpush2.msra.mxu0 0.0
  %186 = vmatprep.subr.mxu0 0.0
  %187 = vmatpush2.msra.mxu0 0.0
  %188 = vmatprep.subr.mxu0 0.0
  %189 = vmatpush2.msra.mxu0 0.0
  %190 = vmatprep.subr.mxu0 0.0
  %191 = vmatpush2.msra.mxu0 0.0
  %192 = vmatprep.subr.mxu0 0.0
  %193 = vmatpush2.msra.mxu0 0.0
  %194 = vmatprep.subr.mxu0 0.0
  %195 = vmatpush2.msra.mxu0 0.0
  %196 = vmatprep.mubr.f32.mxu0 0.0
  %197 = vmatmul.mubr.f32.gmra.mxu0 %v130
  %v198 = vpop.f32.mrf.mxu0
  %v199 = vadd.f32 %v126, %v198
  %v200 = vpop.f32.mrf.mxu0
  %201 = vdwg.mxu0
  %v202 = vmax.f32 %v199, 0.0
  %v203 = vld [vmem:[%s5] sm:$0xff]
  %v204 = vld [vmem:[%s5 + $0x8] sm:$0xff]
  %v205 = vld [vmem:[%s5 + $0x10] sm:$0xff]
  %v206 = vld [vmem:[%s5 + $0x18] sm:$0xff]
  %v207 = vld [vmem:[%s6] sm:$0x1]
  %v209 = vlaneseq
  %v210 = vshrl.u32 %v209, 7
  %v211 = vsub.s32 0, %v210
  %v212 = vrot.slane %v207, %v211
  %v215 = vsel %vm128, %v202, 0
  %217 = vmatprep.subr.mxu0 0.0
  %218 = vmatpush1.msra.mxu0 0.0
  %219 = vmatprep.subr.mxu0 0.0
  %220 = vmatpush1.msra.mxu0 0.0
  %221 = vmatprep.subr.mxu0 0.0
  %222 = vmatpush1.msra.mxu0 0.0
  %223 = vmatprep.subr.mxu0 0.0
  %224 = vmatpush1.msra.mxu0 0.0
  %225 = vmatprep.subr.mxu0 0.0
  %226 = vmatpush1.msra.mxu0 0.0
  %227 = vmatprep.subr.mxu0 0.0
  %228 = vmatpush1.msra.mxu0 0.0
  %229 = vmatprep.subr.mxu0 0.0
  %230 = vmatpush1.msra.mxu0 0.0
  %231 = vmatprep.subr.mxu0 0.0
  %232 = vmatpush1.msra.mxu0 0.0
  %233 = vmatprep.subr.mxu0 0.0
  %234 = vmatpush1.msra.mxu0 0.0
  %235 = vmatprep.subr.mxu0 0.0
  %236 = vmatpush1.msra.mxu0 0.0
  %237 = vmatprep.subr.mxu0 0.0
  %238 = vmatpush1.msra.mxu0 0.0
  %239 = vmatprep.subr.mxu0 0.0
  %240 = vmatpush1.msra.mxu0 0.0
  %241 = vmatprep.subr.mxu0 0.0
  %242 = vmatpush1.msra.mxu0 %v206
  %243 = vmatprep.subr.mxu0 0.0
  %244 = vmatpush1.msra.mxu0 %v205
  %245 = vmatprep.subr.mxu0 0.0
  %246 = vmatpush1.msra.mxu0 %v204
  %247 = vmatprep.subr.mxu0 0.0
  %248 = vmatpush1.msra.mxu0 %v203
  %249 = vmatprep.subr.mxu0 0.0
  %250 = vmatpush2.msra.mxu0 0.0
  %251 = vmatprep.subr.mxu0 0.0
  %252 = vmatpush2.msra.mxu0 0.0
  %253 = vmatprep.subr.mxu0 0.0
  %254 = vmatpush2.msra.mxu0 0.0
  %255 = vmatprep.subr.mxu0 0.0
  %256 = vmatpush2.msra.mxu0 0.0
  %257 = vmatprep.subr.mxu0 0.0
  %258 = vmatpush2.msra.mxu0 0.0
  %259 = vmatprep.subr.mxu0 0.0
  %260 = vmatpush2.msra.mxu0 0.0
  %261 = vmatprep.subr.mxu0 0.0
  %262 = vmatpush2.msra.mxu0 0.0
  %263 = vmatprep.subr.mxu0 0.0
  %264 = vmatpush2.msra.mxu0 0.0
  %265 = vmatprep.subr.mxu0 0.0
  %266 = vmatpush2.msra.mxu0 0.0
  %267 = vmatprep.subr.mxu0 0.0
  %268 = vmatpush2.msra.mxu0 0.0
  %269 = vmatprep.subr.mxu0 0.0
  %270 = vmatpush2.msra.mxu0 0.0
  %271 = vmatprep.subr.mxu0 0.0
  %272 = vmatpush2.msra.mxu0 0.0
  %273 = vmatprep.subr.mxu0 0.0
  %274 = vmatpush2.msra.mxu0 0.0
  %275 = vmatprep.subr.mxu0 0.0
  %276 = vmatpush2.msra.mxu0 0.0
  %277 = vmatprep.subr.mxu0 0.0
  %278 = vmatpush2.msra.mxu0 0.0
  %279 = vmatprep.subr.mxu0 0.0
  %280 = vmatpush2.msra.mxu0 0.0
  %281 = vmatprep.mubr.f32.mxu0 0.0
  %282 = vmatmul.mubr.f32.gmra.mxu0 %v215
  %v283 = vpop.f32.mrf.mxu0
  %v284 = vadd.f32 %v212, %v283
  %v285 = vpop.f32.mrf.mxu0
  %286 = vdwg.mxu0
  %vm287 = vcmask 64512
  %288 = vst.msk [vmem:[%s7] sm:$0xff] %vm287, %v284
  // Predicated region
  $region30: #{policy_network_forward.1} parent=0 // pred_check
    _
  $region31: #{policy_network_forward.1} parent=0 // pred_check_branch
    %290 = sbr.rel (0) target = $region33
  $region32: #{policy_network_forward.1} parent=0 // pred_region
    _
  $region33: #{policy_network_forward.1} parent=0 // pred_fallthru
    _
  // Predicated region
  $region34: #{policy_network_forward.1} parent=0 // pred_check
    _
  $region35: #{policy_network_forward.1} parent=0 // pred_check_branch
    %292 = sbr.rel (0) target = $region37
  $region36: #{policy_network_forward.1} parent=0 // pred_region
    _
  $region37: #{policy_network_forward.1} parent=0 // pred_fallthru
    _

</llo_original>
